<compile_context>
chip_gen: v6e
topology: v6e:2x2x1
jax: 0.10.0
libtpu: 0.0.40
codegen_flags: <defaults>
</compile_context>

<pallas_src>
import functools

import jax
import jax.numpy as jnp
from jax import lax
from jax.experimental import pallas as pl
from jax.experimental.pallas import tpu as pltpu

_EPS = 1e-5                           # torch.nn.BatchNorm2d default eps
_VMEM_LIMIT = 32 * 1024 * 1024        # safe on v5e/v6e/v7x (<= half of v7x physical VMEM)
_FAST_BN_VMEM_BUDGET = 16 * 1024 * 1024
_FAST_BN_MAX_BATCH = 16               # bounds the static per-sample matmul loop


def _round_up(x, m):
    return (x + m - 1) // m * m


def _pick_tile(total, base, cap):
    """Largest multiple of `base` that divides `total` (itself a multiple of base), <= cap."""
    q = total // base
    best = 1
    d = 1
    while d * d <= q:
        if q % d == 0:
            for c in (d, q // d):
                if base * c <= cap:
                    best = max(best, c)
        d += 1
    return base * best


# ------------------------------ Pallas kernels ------------------------------


def _conv_stats_kernel(w_ref, x_ref, conv_ref, sum_ref, ssq_ref, acc_ref):
    """2-pass BN, pass 1: K-tiled matmul acc += W @ X; at the last K step store the
    bf16 conv tile (already in per-sample NCHW-ordered layout) and per-tile per-channel
    sum / sum-of-squares (f32, taken from the f32 accumulator)."""
    k = pl.program_id(1)

    @pl.when(k == 0)
    def _():
        acc_ref[...] = jnp.zeros_like(acc_ref)

    acc_ref[...] += jnp.dot(w_ref[...], x_ref[0],
                            preferred_element_type=jnp.float32)

    @pl.when(k == pl.num_programs(1) - 1)
    def _():
        acc = acc_ref[...]                                   # (o_pad, tm) f32
        conv_ref[0] = acc.astype(conv_ref.dtype)             # bf16 intermediate
        sum_ref[0] = jnp.sum(acc, axis=1, keepdims=True)     # (o_pad, 1)
        ssq_ref[0] = jnp.sum(acc * acc, axis=1, keepdims=True)


def _bn_act_kernel(conv_ref, scale_ref, shift_ref, out_ref, *, use_relu):
    """2-pass BN, pass 2: y = conv * scale + shift (+ ReLU), streaming elementwise."""
    y = conv_ref[0].astype(jnp.float32) * scale_ref[...] + shift_ref[...]
    if use_relu:
        y = jnp.maximum(y, 0.0)
    out_ref[0] = y.astype(out_ref.dtype)


def _conv_bias_act_kernel(w_ref, x_ref, bias_ref, out_ref, acc_ref, *, use_relu):
    """No-BN path: K-tiled matmul + bias + optional ReLU, fused in one pass."""
    k = pl.program_id(1)

    @pl.when(k == 0)
    def _():
        acc_ref[...] = jnp.zeros_like(acc_ref)

    acc_ref[...] += jnp.dot(w_ref[...], x_ref[0],
                            preferred_element_type=jnp.float32)

    @pl.when(k == pl.num_programs(1) - 1)
    def _():
        y = acc_ref[...] + bias_ref[...]
        if use_relu:
            y = jnp.maximum(y, 0.0)
        out_ref[0] = y.astype(out_ref.dtype)


def _conv_bn_act_fused_kernel(w_ref, x_ref, gamma_ref, beta_ref, out_ref, acc_ref,
                              *, use_relu, m_real, n_samples):
    """Single-pass fused conv + train-mode BN + ReLU (used when the whole conv output
    fits in VMEM).  The f32 conv result never touches HBM; per-channel statistics are
    reduced on-chip; the f32 output is written once, in final NCHW-ordered layout."""
    k = pl.program_id(0)

    @pl.when(k == 0)
    def _():
        acc_ref[...] = jnp.zeros_like(acc_ref)

    w = w_ref[...]                                            # (o_pad, tk)
    for s in range(n_samples):                                # static, bounded by gate
        acc_ref[s] += jnp.dot(w, x_ref[s], preferred_element_type=jnp.float32)

    @pl.when(k == pl.num_programs(0) - 1)
    def _():
        acc = acc_ref[...]                                    # (N, o_pad, hw_pad) f32
        # Padded HW columns / padded channels are exactly zero -> stats (divided by
        # the real pixel count) are unaffected.
        per_ch = jnp.sum(acc, axis=0)                         # (o_pad, hw_pad)
        per_ch_sq = jnp.sum(acc * acc, axis=0)
        tot = jnp.sum(per_ch, axis=1, keepdims=True)          # (o_pad, 1)
        tot_sq = jnp.sum(per_ch_sq, axis=1, keepdims=True)
        inv_cnt = 1.0 / m_real
        mean = tot * inv_cnt
        var = jnp.maximum(tot_sq * inv_cnt - mean * mean, 0.0)  # clamp: cancellation
        inv = lax.rsqrt(var + _EPS)
        scale = gamma_ref[...] * inv                          # (o_pad, 1)
        shift = beta_ref[...] - mean * scale
        y = acc * scale[None] + shift[None]
        if use_relu:
            y = jnp.maximum(y, 0.0)
        out_ref[...] = y.astype(out_ref.dtype)


# ------------------------------ host-side glue -------------------------------


def _im2col_3d(x, kh, kw, stride, padding, dilation):
    """x: (N, Cin, H, W) -> (N, Cin*Kh*Kw, Ho*Wo) im2col, plus (Ho, Wo).

    Row order (dim 1) is channel-major then (kh, kw) — same as weight.reshape(O, -1).
    The batch dim is kept leading, so the final reshape is contiguous (no transpose,
    no extra HBM relayout copy).  Built in x.dtype (bf16) to halve bytes.
    """
    n, c, h, w = x.shape
    xp = jnp.pad(x, ((0, 0), (0, 0), (padding, padding), (padding, padding)))
    ho = (h + 2 * padding - dilation * (kh - 1) - 1) // stride + 1
    wo = (w + 2 * padding - dilation * (kw - 1) - 1) // stride + 1
    patches = []
    for i in range(kh):
        for j in range(kw):
            h0 = i * dilation
            w0 = j * dilation
            patches.append(
                xp[:, :, h0:h0 + (ho - 1) * stride + 1:stride,
                          w0:w0 + (wo - 1) * stride + 1:stride])
    cols = jnp.stack(patches, axis=2)               # (N, C, Kh*Kw, Ho, Wo)
    cols = cols.reshape(n, c * kh * kw, ho * wo)    # contiguous reshape -> free
    return cols, ho, wo


def conv_block_forward(x, weight, bias=None, gamma=None, beta=None, *,
                       stride=1, padding=0, dilation=1, groups=1,
                       use_bn=False, use_relu=False, tm=1024, tk=512):
    """Forward pass of ConvBlock. x: (N, Cin, H, W) -> (N, O, Ho, Wo), float32."""
    assert groups == 1  # TODO(synk): grouped convolution (groups > 1) not implemented.
    n, cin, h, w = x.shape
    o, _, kh, kw = weight.shape

    # bf16 operands for the MXU; f32 accumulation happens inside the kernels.
    cols, ho, wo = _im2col_3d(x.astype(jnp.bfloat16), kh, kw, stride, padding, dilation)
    k_dim = cin * kh * kw
    hw = ho * wo
    m_real = n * hw

    o_pad = _round_up(o, 8)                 # sublane multiple
    hw_pad = _round_up(hw, 128)             # lane multiple (per-sample pixel axis)

    # --- K padding / tiling: no zero-padding to 128 for small K ---
    if k_dim <= tk:
        k_pad = _round_up(k_dim, 16)        # bf16 sublane multiple; single K step
        tk_ = k_pad
    else:
        k_pad = _round_up(k_dim, 128)       # at most 127 rows of slack
        tk_ = _pick_tile(k_pad, 128, tk)
    n_k = k_pad // tk_

    # --- M (pixel) tiling: tiles divide hw_pad so every output block lands inside a
    # single sample's slab of the (N, O_pad, HW_pad) output -> kernel emits the final
    # NCHW-ordered layout directly (no XLA transpose afterwards). ---
    tm_ = _pick_tile(hw_pad, 128, max(tm, 128))
    q = hw_pad // tm_
    n_m = n * q

    # Zero padding keeps conv results in padded rows/cols exactly 0, so BN statistics
    # (divided by the *real* pixel count m_real) are unaffected.
    x3 = jnp.pad(cols, ((0, 0), (0, k_pad - k_dim), (0, hw_pad - hw)))
    w_p = jnp.pad(weight.reshape(o, k_dim).astype(jnp.bfloat16),
                  ((0, o_pad - o), (0, k_pad - k_dim)))

    w_spec = pl.BlockSpec((o_pad, tk_), lambda i, k: (0, k))
    x_spec = pl.BlockSpec((1, tk_, tm_), lambda i, k: (i // q, k, i % q))
    out3_spec = pl.BlockSpec((1, o_pad, tm_), lambda i, k: (i // q, 0, i % q))
    vec_spec = pl.BlockSpec((o_pad, 1), lambda i, k: (0, 0))
    acc_scratch = pltpu.VMEM((o_pad, tm_), jnp.float32)

    cparams = pltpu.CompilerParams(
        dimension_semantics=("parallel", "arbitrary"),   # M parallel (megacore), K serial
        vmem_limit_bytes=_VMEM_LIMIT)

    if use_bn:
        # A per-channel conv bias is exactly cancelled by train-mode BatchNorm
        # (mean subtraction removes it, variance unchanged) -> skipped here.
        gamma_c = jnp.pad(gamma.astype(jnp.float32), (0, o_pad - o)).reshape(o_pad, 1)
        beta_c = jnp.pad(beta.astype(jnp.float32), (0, o_pad - o)).reshape(o_pad, 1)

        # Conservative VMEM estimate for the single-pass fast path (v7x has 64 MiB).
        fast_bytes = (3 * n * o_pad * hw_pad * 4          # f32 acc + double-buffered out
                      + 2 * n * tk_ * hw_pad * 2          # double-buffered im2col block
                      + 2 * o_pad * tk_ * 2)              # double-buffered weight block
        use_fast = (fast_bytes <= _FAST_BN_VMEM_BUDGET) and (n <= _FAST_BN_MAX_BATCH)

        if use_fast:
            # Single fused pass: no bf16 HBM intermediate, no second kernel launch.
            out3 = pl.pallas_call(
                functools.partial(_conv_bn_act_fused_kernel, use_relu=use_relu,
                                  m_real=float(m_real), n_samples=n),
                grid=(n_k,),
                in_specs=[pl.BlockSpec((o_pad, tk_), lambda k: (0, k)),
                          pl.BlockSpec((n, tk_, hw_pad), lambda k: (0, k, 0)),
                          pl.BlockSpec((o_pad, 1), lambda k: (0, 0)),
                          pl.BlockSpec((o_pad, 1), lambda k: (0, 0))],
                out_specs=pl.BlockSpec((n, o_pad, hw_pad), lambda k: (0, 0, 0)),
                out_shape=jax.ShapeDtypeStruct((n, o_pad, hw_pad), jnp.float32),
                scratch_shapes=[pltpu.VMEM((n, o_pad, hw_pad), jnp.float32)],
                compiler_params=pltpu.CompilerParams(
                    dimension_semantics=("arbitrary",),
                    vmem_limit_bytes=_VMEM_LIMIT),
            )(w_p, x3, gamma_c, beta_c)
        else:
            # Pass 1: conv matmul (bf16 intermediate) + per-M-tile partial stats.
            conv3, sums, ssqs = pl.pallas_call(
                _conv_stats_kernel,
                grid=(n_m, n_k),
                in_specs=[w_spec, x_spec],
                out_specs=(out3_spec,
                           pl.BlockSpec((1, o_pad, 1), lambda i, k: (i, 0, 0)),
                           pl.BlockSpec((1, o_pad, 1), lambda i, k: (i, 0, 0))),
                out_shape=(jax.ShapeDtypeStruct((n, o_pad, hw_pad), jnp.bfloat16),
                           jax.ShapeDtypeStruct((n_m, o_pad, 1), jnp.float32),
                           jax.ShapeDtypeStruct((n_m, o_pad, 1), jnp.float32)),
                scratch_shapes=[acc_scratch],
                compiler_params=cparams,
            )(w_p, x3)

            # Tiny per-channel fold (O(o) work): reduce partial stats, build scale/shift.
            tot_s = jnp.sum(sums, axis=0)                       # (o_pad, 1)
            tot_ss = jnp.sum(ssqs, axis=0)                      # (o_pad, 1)
            mean = tot_s / float(m_real)
            var = jnp.maximum(tot_ss / float(m_real) - mean * mean, 0.0)
            inv = lax.rsqrt(var + _EPS)
            scale = gamma_c * inv
            shift = beta_c - mean * scale

            # Pass 2: wide streaming FMA (+ReLU) over the bf16 conv intermediate.
            tm2 = _pick_tile(hw_pad, 128, 8192)
            q2 = hw_pad // tm2
            out3 = pl.pallas_call(
                functools.partial(_bn_act_kernel, use_relu=use_relu),
                grid=(n * q2,),
                in_specs=[pl.BlockSpec((1, o_pad, tm2),
                                       lambda i: (i // q2, 0, i % q2)),
                          pl.BlockSpec((o_pad, 1), lambda i: (0, 0)),
                          pl.BlockSpec((o_pad, 1), lambda i: (0, 0))],
                out_specs=pl.BlockSpec((1, o_pad, tm2),
                                       lambda i: (i // q2, 0, i % q2)),
                out_shape=jax.ShapeDtypeStruct((n, o_pad, hw_pad), jnp.float32),
                compiler_params=pltpu.CompilerParams(
                    dimension_semantics=("parallel",),
                    vmem_limit_bytes=_VMEM_LIMIT),
            )(conv3, scale, shift)
    else:
        b = bias if bias is not None else jnp.zeros((o,), jnp.float32)
        bias_p = jnp.pad(b.astype(jnp.float32), (0, o_pad - o)).reshape(o_pad, 1)
        out3 = pl.pallas_call(
            functools.partial(_conv_bias_act_kernel, use_relu=use_relu),
            grid=(n_m, n_k),
            in_specs=[w_spec, x_spec, vec_spec],
            out_specs=out3_spec,
            out_shape=jax.ShapeDtypeStruct((n, o_pad, hw_pad), jnp.float32),
            scratch_shapes=[acc_scratch],
            compiler_params=cparams,
        )(w_p, x3, bias_p)

    # Output is already NCHW-ordered; crop only when padding was actually added.
    if o_pad == o and hw_pad == hw:
        out = out3.reshape(n, o, ho, wo)                # free reshape, no copy
    else:
        out = out3[:, :o, :hw].reshape(n, o, ho, wo)    # cheap crop (no transpose)
    return out


# ------------------------------ pure-JAX reference ---------------------------


def _reference(x, weight, bias, gamma, beta, *, stride, padding, dilation,
               use_bn, use_relu):
    dn = jax.lax.conv_dimension_numbers(x.shape, weight.shape,
                                        ("NCHW", "OIHW", "NCHW"))
    y = jax.lax.conv_general_dilated(
        x, weight, (stride, stride),
        [(padding, padding), (padding, padding)],
        rhs_dilation=(dilation, dilation), dimension_numbers=dn)
    if bias is not None:
        y = y + bias[None, :, None, None]
    if use_bn:
        mean = jnp.mean(y, axis=(0, 2, 3), keepdims=True)
        var = jnp.var(y, axis=(0, 2, 3), keepdims=True)
        y = (y - mean) / jnp.sqrt(var + _EPS)
        y = y * gamma[None, :, None, None] + beta[None, :, None, None]
    if use_relu:
        y = jnp.maximum(y, 0.0)
    return y


# ------------------------------------ main ------------------------------------

if __name__ == "__main__":
    key = jax.random.PRNGKey(0)
    k_x, k_w, k_g, k_b, k_bias = jax.random.split(key, 5)

    # ConvBlock(in_channels=4, out_channels=8, kernel_size=3, stride=1, padding=1,
    #           bias=False, use_bn=True, use_relu=True)
    N, Cin, H, W = 2, 4, 16, 16
    O, Kh, Kw = 8, 3, 3

    x = jax.random.normal(k_x, (N, Cin, H, W), jnp.float32)
    weight = 0.1 * jax.random.normal(k_w, (O, Cin, Kh, Kw), jnp.float32)
    gamma = 1.0 + 0.1 * jax.random.normal(k_g, (O,), jnp.float32)
    beta = 0.1 * jax.random.normal(k_b, (O,), jnp.float32)
    bias = 0.1 * jax.random.normal(k_bias, (O,), jnp.float32)

    # bf16 MXU operands -> looser tolerance vs f32 reference.
    TOL = 5e-2

    # Config 1: conv + BN (train-mode batch stats) + ReLU, no bias (single-pass fast path).
    out1 = conv_block_forward(x, weight, None, gamma, beta,
                              stride=1, padding=1, dilation=1, groups=1,
                              use_bn=True, use_relu=True)
    jax.block_until_ready(out1)
    ref1 = _reference(x, weight, None, gamma, beta,
                      stride=1, padding=1, dilation=1, use_bn=True, use_relu=True)
    assert out1.shape == (N, O, H, W)
    assert jnp.allclose(out1, ref1, atol=TOL, rtol=TOL)

    # Config 2: conv(stride=2, padding=0) + bias + ReLU, no BN (fused single-pass).
    out2 = conv_block_forward(x, weight, bias, None, None,
                              stride=2, padding=0, dilation=1, groups=1,
                              use_bn=False, use_relu=True)
    jax.block_until_ready(out2)
    ref2 = _reference(x, weight, bias, None, None,
                      stride=2, padding=0, dilation=1, use_bn=False, use_relu=True)
    assert out2.shape == (N, O, 7, 7)
    assert jnp.allclose(out2, ref2, atol=TOL, rtol=TOL)

    print("KERNEL_OK")
</pallas_src>

<mosaic_0001>
module attributes {stable_mosaic.version = 11 : i64} {
  func.func @_conv_bn_act_fused_kernel(%arg0: i32, %arg1: memref<8x48xbf16, #tpu.memory_space<vmem>>, %arg2: memref<2x48x256xbf16, #tpu.memory_space<vmem>>, %arg3: memref<8x1xf32, #tpu.memory_space<vmem>>, %arg4: memref<8x1xf32, #tpu.memory_space<vmem>>, %arg5: memref<2x8x256xf32, #tpu.memory_space<vmem>>, %arg6: memref<2x8x256xf32, #tpu.memory_space<vmem>>) attributes {dimension_semantics = [#tpu.dimension_semantics<arbitrary>], iteration_bounds = array<i64: 1>, scalar_prefetch = 0 : i64, scratch_operands = 1 : i64, tpu.core_type = #tpu.core_type<tc>, window_params = [{transform_indices = @transform_0, window_bounds = array<i64: 8, 48>}, {transform_indices = @transform_1, window_bounds = array<i64: 2, 48, 256>}, {pipeline_mode = #tpu.pipeline_mode<synchronous>, transform_indices = @transform_2, window_bounds = array<i64: 8, 1>}, {pipeline_mode = #tpu.pipeline_mode<synchronous>, transform_indices = @transform_3, window_bounds = array<i64: 8, 1>}, {pipeline_mode = #tpu.pipeline_mode<synchronous>, transform_indices = @transform_4, window_bounds = array<i64: 2, 8, 256>}]} {
    %c0_i32 = arith.constant 0 : i32
    %0 = arith.cmpi eq, %arg0, %c0_i32 : i32
    %1 = arith.extui %0 : i1 to i32
    %c0_i32_0 = arith.constant 0 : i32
    %2 = arith.cmpi ne, %1, %c0_i32_0 : i32
    scf.if %2 {
      %cst_22 = arith.constant 0.000000e+00 : f32
      %25 = vector.broadcast %cst_22 : f32 to vector<2x8x256xf32>
      %c0_23 = arith.constant 0 : index
      %c0_24 = arith.constant 0 : index
      %c0_25 = arith.constant 0 : index
      %26 = vector.load %arg6[%c0_23, %c0_24, %c0_25] : memref<2x8x256xf32, #tpu.memory_space<vmem>>, vector<2x8x256xf32>
      tpu.vector_store %arg6[%c0_23, %c0_24, %c0_25], %25 {strides = array<i32>} : memref<2x8x256xf32, #tpu.memory_space<vmem>>, vector<2x8x256xf32>,
    } else {
    }
    %c0 = arith.constant 0 : index
    %c0_1 = arith.constant 0 : index
    %3 = vector.load %arg1[%c0, %c0_1] : memref<8x48xbf16, #tpu.memory_space<vmem>>, vector<8x48xbf16>
    %c0_2 = arith.constant 0 : index
    %c0_3 = arith.constant 0 : index
    %c0_4 = arith.constant 0 : index
    %4 = vector.load %arg6[%c0_2, %c0_3, %c0_4] : memref<2x8x256xf32, #tpu.memory_space<vmem>>, vector<1x8x256xf32>
    %5 = vector.shape_cast %4 : vector<1x8x256xf32> to vector<8x256xf32>
    %c0_5 = arith.constant 0 : index
    %c0_6 = arith.constant 0 : index
    %c0_7 = arith.constant 0 : index
    %6 = vector.load %arg2[%c0_5, %c0_6, %c0_7] : memref<2x48x256xbf16, #tpu.memory_space<vmem>>, vector<1x48x256xbf16>
    %7 = vector.shape_cast %6 : vector<1x48x256xbf16> to vector<48x256xbf16>
    %cst = arith.constant dense<0.000000e+00> : vector<8x256xf32>
    %8 = tpu.matmul %3, %7, %cst {dimension_numbers = #tpu.dot_dimension_numbers<[1], [0], [0], [1], [0, 0, 1, 1], [], []>} : vector<8x48xbf16>, vector<48x256xbf16>, vector<8x256xf32> -> vector<8x256xf32>
    %9 = arith.addf %5, %8 : vector<8x256xf32>
    %c0_8 = arith.constant 0 : index
    %c0_9 = arith.constant 0 : index
    %c0_10 = arith.constant 0 : index
    %10 = vector.load %arg6[%c0_8, %c0_9, %c0_10] : memref<2x8x256xf32, #tpu.memory_space<vmem>>, vector<1x8x256xf32>
    %11 = vector.shape_cast %10 : vector<1x8x256xf32> to vector<8x256xf32>
    %12 = vector.shape_cast %9 : vector<8x256xf32> to vector<1x8x256xf32>
    tpu.vector_store %arg6[%c0_8, %c0_9, %c0_10], %12 {strides = array<i32>} : memref<2x8x256xf32, #tpu.memory_space<vmem>>, vector<1x8x256xf32>,
    %c1 = arith.constant 1 : index
    %c0_11 = arith.constant 0 : index
    %c0_12 = arith.constant 0 : index
    %13 = vector.load %arg6[%c1, %c0_11, %c0_12] : memref<2x8x256xf32, #tpu.memory_space<vmem>>, vector<1x8x256xf32>
    %14 = vector.shape_cast %13 : vector<1x8x256xf32> to vector<8x256xf32>
    %c1_13 = arith.constant 1 : index
    %c0_14 = arith.constant 0 : index
    %c0_15 = arith.constant 0 : index
    %15 = vector.load %arg2[%c1_13, %c0_14, %c0_15] : memref<2x48x256xbf16, #tpu.memory_space<vmem>>, vector<1x48x256xbf16>
    %16 = vector.shape_cast %15 : vector<1x48x256xbf16> to vector<48x256xbf16>
    %cst_16 = arith.constant dense<0.000000e+00> : vector<8x256xf32>
    %17 = tpu.matmul %3, %16, %cst_16 {dimension_numbers = #tpu.dot_dimension_numbers<[1], [0], [0], [1], [0, 0, 1, 1], [], []>} : vector<8x48xbf16>, vector<48x256xbf16>, vector<8x256xf32> -> vector<8x256xf32>
    %18 = arith.addf %14, %17 : vector<8x256xf32>
    %c1_17 = arith.constant 1 : index
    %c0_18 = arith.constant 0 : index
    %c0_19 = arith.constant 0 : index
    %19 = vector.load %arg6[%c1_17, %c0_18, %c0_19] : memref<2x8x256xf32, #tpu.memory_space<vmem>>, vector<1x8x256xf32>
    %20 = vector.shape_cast %19 : vector<1x8x256xf32> to vector<8x256xf32>
    %21 = vector.shape_cast %18 : vector<8x256xf32> to vector<1x8x256xf32>
    tpu.vector_store %arg6[%c1_17, %c0_18, %c0_19], %21 {strides = array<i32>} : memref<2x8x256xf32, #tpu.memory_space<vmem>>, vector<1x8x256xf32>,
    %c0_i32_20 = arith.constant 0 : i32
    %22 = arith.cmpi eq, %arg0, %c0_i32_20 : i32
    %23 = arith.extui %22 : i1 to i32
    %c0_i32_21 = arith.constant 0 : i32
    %24 = arith.cmpi ne, %23, %c0_i32_21 : i32
    scf.if %24 {
      %c0_22 = arith.constant 0 : index
      %c0_23 = arith.constant 0 : index
      %c0_24 = arith.constant 0 : index
      %25 = vector.load %arg6[%c0_22, %c0_23, %c0_24] : memref<2x8x256xf32, #tpu.memory_space<vmem>>, vector<2x8x256xf32>
      %cst_25 = arith.constant dense<0.000000e+00> : vector<8x256xf32>
      %26 = vector.multi_reduction <add>, %25, %cst_25 [0] : vector<2x8x256xf32> to vector<8x256xf32>
      %27 = arith.mulf %25, %25 : vector<2x8x256xf32>
      %cst_26 = arith.constant dense<0.000000e+00> : vector<8x256xf32>
      %28 = vector.multi_reduction <add>, %27, %cst_26 [0] : vector<2x8x256xf32> to vector<8x256xf32>
      %cst_27 = arith.constant dense<0.000000e+00> : vector<8xf32>
      %29 = vector.multi_reduction <add>, %26, %cst_27 [1] : vector<8x256xf32> to vector<8xf32>
      %30 = vector.shape_cast %29 : vector<8xf32> to vector<8x1xf32>
      %cst_28 = arith.constant dense<0.000000e+00> : vector<8xf32>
      %31 = vector.multi_reduction <add>, %28, %cst_28 [1] : vector<8x256xf32> to vector<8xf32>
      %32 = vector.shape_cast %31 : vector<8xf32> to vector<8x1xf32>
      %cst_29 = arith.constant 0.001953125 : f32
      %33 = vector.broadcast %cst_29 : f32 to vector<8x1xf32>
      %34 = arith.mulf %30, %33 : vector<8x1xf32>
      %cst_30 = arith.constant 0.001953125 : f32
      %35 = vector.broadcast %cst_30 : f32 to vector<8x1xf32>
      %36 = arith.mulf %32, %35 : vector<8x1xf32>
      %37 = arith.mulf %34, %34 : vector<8x1xf32>
      %38 = arith.subf %36, %37 : vector<8x1xf32>
      %cst_31 = arith.constant 0.000000e+00 : f32
      %39 = vector.broadcast %cst_31 : f32 to vector<8x1xf32>
      %40 = arith.maximumf %38, %39 : vector<8x1xf32>
      %cst_32 = arith.constant 9.99999974E-6 : f32
      %41 = vector.broadcast %cst_32 : f32 to vector<8x1xf32>
      %42 = arith.addf %40, %41 : vector<8x1xf32>
      %43 = math.rsqrt %42 : vector<8x1xf32>
      %c0_33 = arith.constant 0 : index
      %c0_34 = arith.constant 0 : index
      %44 = vector.load %arg3[%c0_33, %c0_34] : memref<8x1xf32, #tpu.memory_space<vmem>>, vector<8x1xf32>
      %45 = arith.mulf %44, %43 : vector<8x1xf32>
      %c0_35 = arith.constant 0 : index
      %c0_36 = arith.constant 0 : index
      %46 = vector.load %arg4[%c0_35, %c0_36] : memref<8x1xf32, #tpu.memory_space<vmem>>, vector<8x1xf32>
      %47 = arith.mulf %34, %45 : vector<8x1xf32>
      %48 = arith.subf %46, %47 : vector<8x1xf32>
      %49 = vector.shape_cast %45 : vector<8x1xf32> to vector<1x8x1xf32>
      %50 = vector.broadcast %49 : vector<1x8x1xf32> to vector<2x8x256xf32>
      %51 = arith.mulf %25, %50 : vector<2x8x256xf32>
      %52 = vector.shape_cast %48 : vector<8x1xf32> to vector<1x8x1xf32>
      %53 = vector.broadcast %52 : vector<1x8x1xf32> to vector<2x8x256xf32>
      %54 = arith.addf %51, %53 : vector<2x8x256xf32>
      %cst_37 = arith.constant 0.000000e+00 : f32
      %55 = vector.broadcast %cst_37 : f32 to vector<2x8x256xf32>
      %56 = arith.maximumf %54, %55 : vector<2x8x256xf32>
      %c0_38 = arith.constant 0 : index
      %c0_39 = arith.constant 0 : index
      %c0_40 = arith.constant 0 : index
      %57 = vector.load %arg5[%c0_38, %c0_39, %c0_40] : memref<2x8x256xf32, #tpu.memory_space<vmem>>, vector<2x8x256xf32>
      tpu.vector_store %arg5[%c0_38, %c0_39, %c0_40], %56 {strides = array<i32>} : memref<2x8x256xf32, #tpu.memory_space<vmem>>, vector<2x8x256xf32>,
    } else {
    }
    return
  }
  func.func @transform_0(%arg0: i32) -> (i32, i32) {
    %c0_i32 = arith.constant 0 : i32
    %c0_i32_0 = arith.constant 0 : i32
    return %c0_i32, %arg0 : i32, i32
  }
  func.func @transform_1(%arg0: i32) -> (i32, i32, i32) {
    %c0_i32 = arith.constant 0 : i32
    %c0_i32_0 = arith.constant 0 : i32
    %c0_i32_1 = arith.constant 0 : i32
    return %c0_i32, %arg0, %c0_i32_0 : i32, i32, i32
  }
  func.func @transform_2(%arg0: i32) -> (i32, i32) {
    %c0_i32 = arith.constant 0 : i32
    %c0_i32_0 = arith.constant 0 : i32
    %c0_i32_1 = arith.constant 0 : i32
    return %c0_i32, %c0_i32_0 : i32, i32
  }
  func.func @transform_3(%arg0: i32) -> (i32, i32) {
    %c0_i32 = arith.constant 0 : i32
    %c0_i32_0 = arith.constant 0 : i32
    %c0_i32_1 = arith.constant 0 : i32
    return %c0_i32, %c0_i32_0 : i32, i32
  }
  func.func @transform_4(%arg0: i32) -> (i32, i32, i32) {
    %c0_i32 = arith.constant 0 : i32
    %c0_i32_0 = arith.constant 0 : i32
    %c0_i32_1 = arith.constant 0 : i32
    %c0_i32_2 = arith.constant 0 : i32
    return %c0_i32, %c0_i32_0, %c0_i32_1 : i32, i32, i32
  }
}

</mosaic_0001>

<llo_original>
// kernel: tpu_custom_call.1
$region0: #{tpu_custom_call.1}
  #allocation0 [shape = 'u32[]', space=smem, size = 0x4, offset = 0x4, fixed_abs, tag = 'smem constant byte address 0x4 - core index']
  #allocation1 [shape = 'u32[144,128]{1,0:T(1,128)}', space=vmem, size = 0x12000, scoped, tag = 'internal scratch']
  #allocation2 [shape = 'f32[2,8,256]{2,1,0:T(8,128)}', space=vmem, size = 0x4000, scoped, tag = 'scratch operand']
  %s0 = inlined_call_operand.vmem [shape: bf16[8,48], index: 0, kind: input, shape index: {}]
  %s1 = inlined_call_operand.hbm [shape: bf16[2,48,256], index: 1, kind: input, shape index: {}]
  %s2 = inlined_call_operand.vmem [shape: f32[8,1], index: 2, kind: input, shape index: {}]
  %s3 = inlined_call_operand.vmem [shape: f32[8,1], index: 3, kind: input, shape index: {}]
  %s4 = inlined_call_operand.hbm [shape: f32[2,8,256], index: 4, kind: output, shape index: {}]
  %s5 = sld [smem:[#allocation0]]
  $region38: #{tpu_custom_call.1} parent=0
    _
  %s7 = ssub.s32 1, %s5
  %s8 = scalar_select 0, %s7, %s5
  $region1: #{tpu_custom_call.1} parent=0
    #allocation3 [shape = 'u8[49152]{0}', space=vmem, size = 0xc000, scoped, tag = 'input window, operand 1, single buffered']
    #allocation4 [shape = 's32[1]{0}', space=sflag, size = 0x4, scoped, tag = 'scoped memory for tpu_custom_call.1']
    #allocation5 [shape = 's32[1]{0}', space=sflag, size = 0x4, scoped, tag = 'scoped memory for tpu_custom_call.1']
    #allocation6 [shape = 'u8[16384]{0}', space=vmem, size = 0x4000, scoped, tag = 'output window, operand 0, single buffered']
    %9 = vsyncpa [#allocation4], 0
    %10 = vsyncpa [#allocation5], 0
    // Predicated region
    $region2: #{tpu_custom_call.1} parent=1 // pred_check
      _
    $region3: #{tpu_custom_call.1} parent=1 // pred_check_branch
      %12 = sbr.rel (0) target = $region5
    $region4: #{tpu_custom_call.1} parent=1 // pred_region
      _
    $region5: #{tpu_custom_call.1} parent=1 // pred_fallthru
      _
    // Predicated region
    $region6: #{tpu_custom_call.1} parent=1 // pred_check
      _
    $region7: #{tpu_custom_call.1} parent=1 // pred_check_branch
      %14 = sbr.rel (0) target = $region9
    $region8: #{tpu_custom_call.1} parent=1 // pred_region
      %s16 = ssub.s32 1536, 1536
      %17 = vsyncadd [#allocation4], %s16
      %s18 = sshll.u32 [#allocation3], 4
      %s19 = int_to_ptr.vmem [resolvable:$true] %s18
      %24 = dma.hbm_to_vmem [thread:$0]  %s1, 1536, %s19, [#allocation4], 128, 128, 8
    $region9: #{tpu_custom_call.1} parent=1 // pred_fallthru
      _
    // Predicated region
    $region10: #{tpu_custom_call.1} parent=1 // pred_check
      _
    $region11: #{tpu_custom_call.1} parent=1 // pred_check_branch
      %26 = sbr.rel (0) target = $region13
    $region12: #{tpu_custom_call.1} parent=1 // pred_region
      _
    $region13: #{tpu_custom_call.1} parent=1 // pred_fallthru
      _
    // Predicated region
    $region14: #{tpu_custom_call.1} parent=1 // pred_check
      _
    $region15: #{tpu_custom_call.1} parent=1 // pred_check_branch
      %28 = sbr.rel (0) target = $region17
    $region16: #{tpu_custom_call.1} parent=1 // pred_region
      _
    $region17: #{tpu_custom_call.1} parent=1 // pred_fallthru
      _
    // Predicated region
    $region18: #{tpu_custom_call.1} parent=1 // pred_check
      _
    $region19: #{tpu_custom_call.1} parent=1 // pred_check_branch
      %30 = sbr.rel (0) target = $region21
    $region20: #{tpu_custom_call.1} parent=1 // pred_region
      %31 = dma.done [#allocation4], 1536
    $region21: #{tpu_custom_call.1} parent=1 // pred_fallthru
      _
    %p33 = scmp.eq.s32.totalorder 0, 0
    // Predicated region
    $region22: #{tpu_custom_call.1} parent=1 // pred_check
      %p34 = pneg %p33
    $region23: #{tpu_custom_call.1} parent=1 // pred_check_branch
      %36 = sbr.rel (%p34) target = $region25
    $region24: #{tpu_custom_call.1} parent=1 // pred_region
      %37 = vst [vmem:[#allocation2] sm:$0xff] 0.0
      %38 = vst [vmem:[#allocation2 + $0x8] sm:$0xff] 0.0
      %39 = vst [vmem:[#allocation2 + $0x10] sm:$0xff] 0.0
      %40 = vst [vmem:[#allocation2 + $0x18] sm:$0xff] 0.0
    $region25: #{tpu_custom_call.1} parent=1 // pred_fallthru
      _
    %v41 = vld [vmem:[%s0] sm:$0xf]
    %v42 = vld [vmem:[#allocation2] sm:$0xff]
    %v43 = vld [vmem:[#allocation2 + $0x8] sm:$0xff]
    %v44 = vld [vmem:[#allocation3] sm:$0xff]
    %v45 = vld [vmem:[#allocation3 + $0x8] sm:$0xff]
    %v46 = vld [vmem:[#allocation3 + $0x10] sm:$0xff]
    %v47 = vld [vmem:[#allocation3 + $0x18] sm:$0xff]
    %v48 = vld [vmem:[#allocation3 + $0x20] sm:$0xff]
    %v49 = vld [vmem:[#allocation3 + $0x28] sm:$0xff]
    %v56 = vunpack.c.l.b16 %v44
    %v57 = vunpack.c.h.b16 %v44
    %v58 = vunpack.c.l.b16 %v45
    %v59 = vunpack.c.h.b16 %v45
    %v60 = vunpack.c.l.b16 %v46
    %v61 = vunpack.c.h.b16 %v46
    %v62 = vunpack.c.l.b16 %v47
    %v63 = vunpack.c.h.b16 %v47
    %v64 = vunpack.c.l.b16 %v48
    %v65 = vunpack.c.h.b16 %v48
    %v66 = vunpack.c.l.b16 %v49
    %v67 = vunpack.c.h.b16 %v49
    %v68 = vpack.c.b16 %v58, %v56
    %v69 = vpack.c.b16 %v59, %v57
    %v70 = vpack.c.b16 %v62, %v60
    %v71 = vpack.c.b16 %v63, %v61
    %v72 = vpack.c.b16 %v66, %v64
    %v73 = vpack.c.b16 %v67, %v65
    %vm80 = vcmask 392192
    %v82 = vsel %vm80, %v41, 0
    %84 = vmatprep.subr.bf16.mxu0 0
    %85 = vmatpush1.bf16.msra.mxu0 0
    %86 = vmatprep.subr.bf16.mxu0 0
    %87 = vmatpush1.bf16.msra.mxu0 0
    %88 = vmatprep.subr.bf16.mxu0 0
    %89 = vmatpush1.bf16.msra.mxu0 0
    %90 = vmatprep.subr.bf16.mxu0 0
    %91 = vmatpush1.bf16.msra.mxu0 0
    %92 = vmatprep.subr.bf16.mxu0 0
    %93 = vmatpush1.bf16.msra.mxu0 0
    %94 = vmatprep.subr.bf16.mxu0 %v73
    %95 = vmatpush1.bf16.msra.mxu0 %v72
    %96 = vmatprep.subr.bf16.mxu0 %v71
    %97 = vmatpush1.bf16.msra.mxu0 %v70
    %98 = vmatprep.subr.bf16.mxu0 %v69
    %99 = vmatpush1.bf16.msra.mxu0 %v68
    %100 = vmatprep.subr.bf16.mxu0 0
    %101 = vmatpush2.bf16.msra.mxu0 0
    %102 = vmatprep.subr.bf16.mxu0 0
    %103 = vmatpush2.bf16.msra.mxu0 0
    %104 = vmatprep.subr.bf16.mxu0 0
    %105 = vmatpush2.bf16.msra.mxu0 0
    %106 = vmatprep.subr.bf16.mxu0 0
    %107 = vmatpush2.bf16.msra.mxu0 0
    %108 = vmatprep.subr.bf16.mxu0 0
    %109 = vmatpush2.bf16.msra.mxu0 0
    %110 = vmatprep.subr.bf16.mxu0 0
    %111 = vmatpush2.bf16.msra.mxu0 0
    %112 = vmatprep.subr.bf16.mxu0 0
    %113 = vmatpush2.bf16.msra.mxu0 0
    %114 = vmatprep.subr.bf16.mxu0 0
    %115 = vmatpush2.bf16.msra.mxu0 0
    %116 = vmatprep.mubr.bf16.mxu0 0
    %117 = vmatmul.mubr.bf16.gmra.mxu0 %v82
    %v118 = vpop.f32.mrf.mxu0
    %v119 = vadd.f32 0.0, %v118
    %v120 = vpop.f32.mrf.mxu0
    %v121 = vadd.f32 0.0, %v120
    %v122 = vpop.f32.mrf.mxu0
    %v123 = vpop.f32.mrf.mxu0
    %124 = vdwg.mxu0
    %v125 = vadd.f32 %v42, %v119
    %v126 = vadd.f32 %v43, %v121
    %127 = vst [vmem:[#allocation2] sm:$0xff] %v125
    %128 = vst [vmem:[#allocation2 + $0x8] sm:$0xff] %v126
    %s129 = scalar_lea.vmem [#allocation2], 16
    %v130 = vld [vmem:[%s129] sm:$0xff]
    %v131 = vld [vmem:[%s129 + $0x8] sm:$0xff]
    %s132 = scalar_lea.vmem [#allocation3], 48
    %v133 = vld [vmem:[%s132] sm:$0xff]
    %v134 = vld [vmem:[%s132 + $0x8] sm:$0xff]
    %v135 = vld [vmem:[%s132 + $0x10] sm:$0xff]
    %v136 = vld [vmem:[%s132 + $0x18] sm:$0xff]
    %v137 = vld [vmem:[%s132 + $0x20] sm:$0xff]
    %v138 = vld [vmem:[%s132 + $0x28] sm:$0xff]
    %v145 = vunpack.c.l.b16 %v133
    %v146 = vunpack.c.h.b16 %v133
    %v147 = vunpack.c.l.b16 %v134
    %v148 = vunpack.c.h.b16 %v134
    %v149 = vunpack.c.l.b16 %v135
    %v150 = vunpack.c.h.b16 %v135
    %v151 = vunpack.c.l.b16 %v136
    %v152 = vunpack.c.h.b16 %v136
    %v153 = vunpack.c.l.b16 %v137
    %v154 = vunpack.c.h.b16 %v137
    %v155 = vunpack.c.l.b16 %v138
    %v156 = vunpack.c.h.b16 %v138
    %v157 = vpack.c.b16 %v147, %v145
    %v158 = vpack.c.b16 %v148, %v146
    %v159 = vpack.c.b16 %v151, %v149
    %v160 = vpack.c.b16 %v152, %v150
    %v161 = vpack.c.b16 %v155, %v153
    %v162 = vpack.c.b16 %v156, %v154
    %169 = vmatprep.subr.bf16.mxu0 0
    %170 = vmatpush1.bf16.msra.mxu0 0
    %171 = vmatprep.subr.bf16.mxu0 0
    %172 = vmatpush1.bf16.msra.mxu0 0
    %173 = vmatprep.subr.bf16.mxu0 0
    %174 = vmatpush1.bf16.msra.mxu0 0
    %175 = vmatprep.subr.bf16.mxu0 0
    %176 = vmatpush1.bf16.msra.mxu0 0
    %177 = vmatprep.subr.bf16.mxu0 0
    %178 = vmatpush1.bf16.msra.mxu0 0
    %179 = vmatprep.subr.bf16.mxu0 %v162
    %180 = vmatpush1.bf16.msra.mxu0 %v161
    %181 = vmatprep.subr.bf16.mxu0 %v160
    %182 = vmatpush1.bf16.msra.mxu0 %v159
    %183 = vmatprep.subr.bf16.mxu0 %v158
    %184 = vmatpush1.bf16.msra.mxu0 %v157
    %185 = vmatprep.subr.bf16.mxu0 0
    %186 = vmatpush2.bf16.msra.mxu0 0
    %187 = vmatprep.subr.bf16.mxu0 0
    %188 = vmatpush2.bf16.msra.mxu0 0
    %189 = vmatprep.subr.bf16.mxu0 0
    %190 = vmatpush2.bf16.msra.mxu0 0
    %191 = vmatprep.subr.bf16.mxu0 0
    %192 = vmatpush2.bf16.msra.mxu0 0
    %193 = vmatprep.subr.bf16.mxu0 0
    %194 = vmatpush2.bf16.msra.mxu0 0
    %195 = vmatprep.subr.bf16.mxu0 0
    %196 = vmatpush2.bf16.msra.mxu0 0
    %197 = vmatprep.subr.bf16.mxu0 0
    %198 = vmatpush2.bf16.msra.mxu0 0
    %199 = vmatprep.subr.bf16.mxu0 0
    %200 = vmatpush2.bf16.msra.mxu0 0
    %201 = vmatprep.mubr.bf16.mxu0 0
    %202 = vmatmul.mubr.bf16.gmra.mxu0 %v82
    %v203 = vpop.f32.mrf.mxu0
    %v204 = vadd.f32 0.0, %v203
    %v205 = vpop.f32.mrf.mxu0
    %v206 = vadd.f32 0.0, %v205
    %v207 = vpop.f32.mrf.mxu0
    %v208 = vpop.f32.mrf.mxu0
    %209 = vdwg.mxu0
    %v210 = vadd.f32 %v130, %v204
    %v211 = vadd.f32 %v131, %v206
    %212 = vst [vmem:[%s129] sm:$0xff] %v210
    %213 = vst [vmem:[%s129 + $0x8] sm:$0xff] %v211
    // Predicated region
    $region26: #{tpu_custom_call.1} parent=1 // pred_check
      %p214 = pneg %p33
    $region27: #{tpu_custom_call.1} parent=1 // pred_check_branch
      %216 = sbr.rel (%p214) target = $region29
    $region28: #{tpu_custom_call.1} parent=1 // pred_region
      %v217 = vld [vmem:[#allocation2] sm:$0xff]
      %v218 = vld [vmem:[#allocation2 + $0x8] sm:$0xff]
      %v219 = vld [vmem:[#allocation2 + $0x10] sm:$0xff]
      %v220 = vld [vmem:[#allocation2 + $0x18] sm:$0xff]
      %v221 = vadd.f32 %v217, %v219
      %v222 = vadd.f32 %v218, %v220
      %v223 = vmul.f32 %v217, %v217
      %v224 = vmul.f32 %v218, %v218
      %v225 = vmul.f32 %v219, %v219
      %v226 = vmul.f32 %v220, %v220
      %v227 = vadd.f32 %v223, %v225
      %v228 = vadd.f32 %v224, %v226
      %v229 = vadd.f32 %v221, %v222
      %230 = vadd.xlane.f32.xlu0 %v229
      %v231 = vpop.xlane.xlu0 %230
      %v232 = vadd.f32 %v227, %v228
      %233 = vadd.xlane.f32.xlu0 %v232
      %v234 = vpop.xlane.xlu0 %233
      %v235 = vmul.f32 %v231, 0.001953125
      %v236 = vmul.f32 %v234, 0.001953125
      %v237 = vmul.f32 %v235, %v235
      %v238 = vsub.f32 %v236, %v237
      %v239 = vmax.f32 %v238, 0.0
      %v240 = vadd.f32 %v239, 1e-05
      %v241 = vrsqrt.pop %v240
      %v242 = vld [vmem:[%s2] sm:$0xff]
      %v243 = vmul.f32 %v242, %v241
      %v244 = vld [vmem:[%s3] sm:$0xff]
      %v245 = vmul.f32 %v235, %v243
      %v246 = vsub.f32 %v244, %v245
      %248 = vset.pattern.permute.xlu0 0
      %249 = vperm.xlu0 %248, %v243
      %v250 = vpop.permute.xlu0 %249
      %v252 = vmul.f32 %v217, %v250
      %v253 = vmul.f32 %v218, %v250
      %v254 = vmul.f32 %v219, %v250
      %v255 = vmul.f32 %v220, %v250
      %257 = vset.pattern.permute.xlu0 0
      %258 = vperm.xlu0 %257, %v246
      %v259 = vpop.permute.xlu0 %258
      %v261 = vadd.f32 %v252, %v259
      %v262 = vadd.f32 %v253, %v259
      %v263 = vadd.f32 %v254, %v259
      %v264 = vadd.f32 %v255, %v259
      %v265 = vmax.f32 %v261, 0.0
      %v266 = vmax.f32 %v262, 0.0
      %v267 = vmax.f32 %v263, 0.0
      %v268 = vmax.f32 %v264, 0.0
      %269 = vst [vmem:[#allocation6] sm:$0xff] %v265
      %270 = vst [vmem:[#allocation6 + $0x8] sm:$0xff] %v266
      %271 = vst [vmem:[#allocation6 + $0x10] sm:$0xff] %v267
      %272 = vst [vmem:[#allocation6 + $0x18] sm:$0xff] %v268
    $region29: #{tpu_custom_call.1} parent=1 // pred_fallthru
      _
    // Predicated region
    $region30: #{tpu_custom_call.1} parent=1 // pred_check
      _
    $region31: #{tpu_custom_call.1} parent=1 // pred_check_branch
      %274 = sbr.rel (0) target = $region33
    $region32: #{tpu_custom_call.1} parent=1 // pred_region
      %s276 = ssub.s32 512, 512
      %277 = vsyncadd [#allocation5], %s276
      %s278 = sshll.u32 [#allocation6], 4
      %s279 = int_to_ptr.vmem [resolvable:$true] %s278
      %284 = dma.vmem_to_hbm [thread:$0]  %s279, 512, %s4, [#allocation5], 256, 256, 16
    $region33: #{tpu_custom_call.1} parent=1 // pred_fallthru
      _
    // Predicated region
    $region34: #{tpu_custom_call.1} parent=1 // pred_check
      _
    $region35: #{tpu_custom_call.1} parent=1 // pred_check_branch
      %286 = sbr.rel (0) target = $region37
    $region36: #{tpu_custom_call.1} parent=1 // pred_region
      %287 = dma.done [#allocation5], 512
    $region37: #{tpu_custom_call.1} parent=1 // pred_fallthru
      _
    %288 = vsyncpa [#allocation4], 1
    %289 = vsyncpa [#allocation5], 1

</llo_original>
